<compile_context>
chip_gen: v7x
topology: tpu7x:2x2x1
jax: 0.10.0
libtpu: 0.0.40
codegen_flags: <defaults>
</compile_context>

<pallas_src>
import jax
import jax.numpy as jnp
from jax.experimental import pallas as pl
from jax.experimental.pallas import tpu as pltpu


def _round_up(x, m):
    return ((x + m - 1) // m) * m


# ---------------------------------------------------------------------------
# Pallas kernel: fused (im2col-matmul conv) + bias + per-channel PReLU
# ---------------------------------------------------------------------------
def _conv_bias_prelu_kernel(x_ref, w_ref, ba_ref, o_ref):
    # x_ref : (TM, Kpad)   bf16  im2col patches tile
    # w_ref : (Kpad, Cpad) bf16  reshaped + zero-padded 3x3 conv weights
    # ba_ref: (8, Cpad)    f32   row 0 = bias, row 1 = PReLU slope (rest zero)
    # o_ref : (TM, Cpad)   f32   lane-dense output tile
    y = jnp.dot(x_ref[...], w_ref[...], preferred_element_type=jnp.float32)
    b = ba_ref[0:1, :]          # (1, Cpad) f32
    a = ba_ref[1:2, :]          # (1, Cpad) f32
    y = y + b
    o_ref[...] = jnp.where(y >= 0.0, y, a * y)


def conv3x3_prelu(x_nhwc, w_oihw, bias, alpha, stride):
    """3x3 conv (padding=1, given stride) + bias + PReLU via a Pallas matmul kernel.

    x_nhwc : (N, H, W, Cin) float32
    w_oihw : (Cout, Cin, 3, 3) float32 (PyTorch layout)
    bias   : (Cout,)
    alpha  : (Cout,)  PReLU slopes
    """
    N, H, W, Cin = x_nhwc.shape
    Cout = w_oihw.shape[0]
    Hout = (H + 2 - 3) // stride + 1
    Wout = (W + 2 - 3) // stride + 1

    # --- glue: pad + extract the 9 shifted taps (im2col) -------------------
    xp = jnp.pad(x_nhwc, ((0, 0), (1, 1), (1, 1), (0, 0)))
    taps = []
    for ky in range(3):
        for kx in range(3):
            taps.append(
                xp[:,
                   ky: ky + (Hout - 1) * stride + 1: stride,
                   kx: kx + (Wout - 1) * stride + 1: stride,
                   :]
            )
    patches = jnp.stack(taps, axis=3)          # (N, Hout, Wout, 9, Cin)
    M = N * Hout * Wout
    K = 9 * Cin
    patches = patches.reshape(M, K)

    # --- padding for lane/sublane density -----------------------------------
    Kpad = _round_up(K, 8)                     # stage-1 K=27 -> 32
    Cpad = 128 * pl.cdiv(Cout, 128)            # lane-dense output channels

    # --- M tiling: pad M to a multiple of TM; TM sized for v7x 64 MiB VMEM --
    TM_MAX = 1024
    TM = min(TM_MAX, _round_up(M, 8))
    Mpad = _round_up(M, TM)
    grid = (Mpad // TM,)

    patches = jnp.pad(patches, ((0, Mpad - M), (0, Kpad - K))).astype(jnp.bfloat16)

    # weight: (Cout, Cin, kh, kw) -> (kh, kw, Cin, Cout) -> (K, Cout) -> padded
    wmat = jnp.transpose(w_oihw, (2, 3, 1, 0)).reshape(K, Cout)
    wmat = jnp.pad(wmat, ((0, Kpad - K), (0, Cpad - Cout))).astype(jnp.bfloat16)

    # bias + PReLU slope packed into one sublane-aligned f32 operand
    ba = jnp.zeros((8, Cpad), jnp.float32)
    ba = ba.at[0, :Cout].set(bias.astype(jnp.float32))
    ba = ba.at[1, :Cout].set(alpha.astype(jnp.float32))

    cost = pl.CostEstimate(
        flops=2 * Mpad * Kpad * Cpad,
        transcendentals=0,
        bytes_accessed=Mpad * Kpad * 2 + Kpad * Cpad * 2 + 8 * Cpad * 4
                       + Mpad * Cpad * 4,
    )

    out = pl.pallas_call(
        _conv_bias_prelu_kernel,
        out_shape=jax.ShapeDtypeStruct((Mpad, Cpad), jnp.float32),
        grid_spec=pltpu.PrefetchScalarGridSpec(
            num_scalar_prefetch=0,
            grid=grid,
            in_specs=[
                pl.BlockSpec((TM, Kpad), lambda i: (i, 0)),
                pl.BlockSpec((Kpad, Cpad), lambda i: (0, 0)),
                pl.BlockSpec((8, Cpad), lambda i: (0, 0)),
            ],
            out_specs=pl.BlockSpec((TM, Cpad), lambda i: (i, 0)),
        ),
        compiler_params=pltpu.CompilerParams(
            dimension_semantics=("parallel",),
            vmem_limit_bytes=32 * 1024 * 1024,
        ),
        cost_estimate=cost,
    )(patches, wmat, ba)

    out = out[:M, :Cout]
    return out.reshape(N, Hout, Wout, Cout)


# ---------------------------------------------------------------------------
# Encoder (IFRNet_S): 4 pyramid stages, each = conv(s=2)+PReLU, conv(s=1)+PReLU
# ---------------------------------------------------------------------------
def init_encoder_params(config, key):
    """Deterministic synthetic parameter init (shapes match nn.Conv2d / nn.PReLU)."""
    params = {}
    names = []
    for p in (1, 2, 3, 4):
        names.append((f"encoder.pyramid{p}.0.0", 2))  # first conv: stride 2
        names.append((f"encoder.pyramid{p}.1.0", 1))  # second conv: stride 1
    for idx, (name, stride) in enumerate(names):
        cin, cout = config[name]
        kw_key, b_key, a_key = jax.random.split(jax.random.fold_in(key, idx), 3)
        scale = 1.0 / (cin * 9) ** 0.5
        params[name] = {
            "w": jax.random.normal(kw_key, (cout, cin, 3, 3), jnp.float32) * scale,
            "b": jax.random.normal(b_key, (cout,), jnp.float32) * 0.01,
            # PyTorch PReLU default init is 0.25; add a tiny deterministic jitter
            "alpha": 0.25 + 0.01 * jax.random.normal(a_key, (cout,), jnp.float32),
            "stride": stride,
        }
    return params


def encoder_forward(params, img_nchw):
    """Matches Encoder.forward: returns (f1, f2, f3, f4), each in NCHW."""
    x = jnp.transpose(img_nchw, (0, 2, 3, 1))  # NCHW -> NHWC
    feats = []
    for p in (1, 2, 3, 4):
        for sub in (0, 1):
            name = f"encoder.pyramid{p}.{sub}.0"
            pp = params[name]
            x = conv3x3_prelu(x, pp["w"], pp["b"], pp["alpha"], pp["stride"])
        feats.append(jnp.transpose(x, (0, 3, 1, 2)))  # NHWC -> NCHW
    return tuple(feats)


# ---------------------------------------------------------------------------
# Pure-JAX reference (lax conv, f32) to validate the Pallas path
# ---------------------------------------------------------------------------
def _ref_conv_prelu(x_nchw, w, b, alpha, stride):
    y = jax.lax.conv_general_dilated(
        x_nchw, w, window_strides=(stride, stride),
        padding=((1, 1), (1, 1)),
        dimension_numbers=("NCHW", "OIHW", "NCHW"))
    y = y + b.reshape(1, -1, 1, 1)
    a = alpha.reshape(1, -1, 1, 1)
    return jnp.where(y >= 0, y, a * y)


def encoder_forward_ref(params, img_nchw):
    x = img_nchw
    feats = []
    for p in (1, 2, 3, 4):
        for sub in (0, 1):
            pp = params[f"encoder.pyramid{p}.{sub}.0"]
            x = _ref_conv_prelu(x, pp["w"], pp["b"], pp["alpha"], pp["stride"])
        feats.append(x)
    return tuple(feats)


if __name__ == "__main__":
    # Small synthetic config (in_channels, out_channels) per conv, IFRNet_S-style
    config = {
        "encoder.pyramid1.0.0": (3, 8),   "encoder.pyramid1.1.0": (8, 8),
        "encoder.pyramid2.0.0": (8, 16),  "encoder.pyramid2.1.0": (16, 16),
        "encoder.pyramid3.0.0": (16, 24), "encoder.pyramid3.1.0": (24, 24),
        "encoder.pyramid4.0.0": (24, 32), "encoder.pyramid4.1.0": (32, 32),
    }

    key = jax.random.PRNGKey(0)
    pkey, xkey = jax.random.split(key)
    params = init_encoder_params(config, pkey)

    # NCHW input, like the PyTorch module
    img = jax.random.normal(xkey, (2, 3, 32, 32), jnp.float32)

    feats = jax.block_until_ready(encoder_forward(params, img))
    refs = jax.block_until_ready(encoder_forward_ref(params, img))

    expected_shapes = [(2, 8, 16, 16), (2, 16, 8, 8), (2, 24, 4, 4), (2, 32, 2, 2)]
    for f, r, es in zip(feats, refs, expected_shapes):
        assert f.shape == es, (f.shape, es)
        # bf16 MXU inputs with f32 accumulation: loosened tolerance vs f32 ref.
        assert jnp.allclose(f, r, atol=5e-2, rtol=5e-2), float(jnp.abs(f - r).max())

    print("KERNEL_OK")
</pallas_src>

<mosaic_0001>
module attributes {stable_mosaic.version = 11 : i64} {
  func.func @_conv_bias_prelu_kernel(%arg0: i32, %arg1: memref<512x32xbf16, #tpu.memory_space<vmem>>, %arg2: memref<32x128xbf16, #tpu.memory_space<vmem>>, %arg3: memref<8x128xf32, #tpu.memory_space<vmem>>, %arg4: memref<512x128xf32, #tpu.memory_space<vmem>>) attributes {dimension_semantics = [#tpu.dimension_semantics<parallel>], iteration_bounds = array<i64: 1>, scalar_prefetch = 0 : i64, scratch_operands = 0 : i64, tpu.core_type = #tpu.core_type<tc>, window_params = [{transform_indices = @transform_0, window_bounds = array<i64: 512, 32>}, {pipeline_mode = #tpu.pipeline_mode<synchronous>, transform_indices = @transform_1, window_bounds = array<i64: 32, 128>}, {pipeline_mode = #tpu.pipeline_mode<synchronous>, transform_indices = @transform_2, window_bounds = array<i64: 8, 128>}, {transform_indices = @transform_3, window_bounds = array<i64: 512, 128>}]} {
    %c0 = arith.constant 0 : index
    %c0_0 = arith.constant 0 : index
    %0 = vector.load %arg1[%c0, %c0_0] : memref<512x32xbf16, #tpu.memory_space<vmem>>, vector<512x32xbf16>
    %c0_1 = arith.constant 0 : index
    %c0_2 = arith.constant 0 : index
    %1 = vector.load %arg2[%c0_1, %c0_2] : memref<32x128xbf16, #tpu.memory_space<vmem>>, vector<32x128xbf16>
    %cst = arith.constant dense<0.000000e+00> : vector<512x128xf32>
    %2 = tpu.matmul %0, %1, %cst {dimension_numbers = #tpu.dot_dimension_numbers<[1], [0], [0], [1], [0, 0, 1, 1], [], []>} : vector<512x32xbf16>, vector<32x128xbf16>, vector<512x128xf32> -> vector<512x128xf32>
    %c0_3 = arith.constant 0 : index
    %c0_4 = arith.constant 0 : index
    %3 = vector.load %arg3[%c0_3, %c0_4] : memref<8x128xf32, #tpu.memory_space<vmem>>, vector<1x128xf32>
    %c1 = arith.constant 1 : index
    %c0_5 = arith.constant 0 : index
    %4 = vector.load %arg3[%c1, %c0_5] : memref<8x128xf32, #tpu.memory_space<vmem>>, vector<1x128xf32>
    %5 = vector.broadcast %3 : vector<1x128xf32> to vector<512x128xf32>
    %6 = arith.addf %2, %5 : vector<512x128xf32>
    %cst_6 = arith.constant 0.000000e+00 : f32
    %7 = vector.broadcast %cst_6 : f32 to vector<512x128xf32>
    %8 = arith.cmpf oge, %6, %7 : vector<512x128xf32>
    %9 = vector.broadcast %4 : vector<1x128xf32> to vector<512x128xf32>
    %10 = arith.mulf %9, %6 : vector<512x128xf32>
    %11 = arith.select %8, %6, %10 : vector<512x128xi1>, vector<512x128xf32>
    %c0_7 = arith.constant 0 : index
    %c0_8 = arith.constant 0 : index
    %12 = vector.load %arg4[%c0_7, %c0_8] : memref<512x128xf32, #tpu.memory_space<vmem>>, vector<512x128xf32>
    tpu.vector_store %arg4[%c0_7, %c0_8], %11 {strides = array<i32>} : memref<512x128xf32, #tpu.memory_space<vmem>>, vector<512x128xf32>,
    return
  }
  func.func @transform_0(%arg0: i32) -> (i32, i32) {
    %c0_i32 = arith.constant 0 : i32
    %c0_i32_0 = arith.constant 0 : i32
    return %arg0, %c0_i32 : i32, i32
  }
  func.func @transform_1(%arg0: i32) -> (i32, i32) {
    %c0_i32 = arith.constant 0 : i32
    %c0_i32_0 = arith.constant 0 : i32
    %c0_i32_1 = arith.constant 0 : i32
    return %c0_i32, %c0_i32_0 : i32, i32
  }
  func.func @transform_2(%arg0: i32) -> (i32, i32) {
    %c0_i32 = arith.constant 0 : i32
    %c0_i32_0 = arith.constant 0 : i32
    %c0_i32_1 = arith.constant 0 : i32
    return %c0_i32, %c0_i32_0 : i32, i32
  }
  func.func @transform_3(%arg0: i32) -> (i32, i32) {
    %c0_i32 = arith.constant 0 : i32
    %c0_i32_0 = arith.constant 0 : i32
    return %arg0, %c0_i32 : i32, i32
  }
}

</mosaic_0001>

<llo_original>
// kernel: tpu_custom_call.1
$region0: #{tpu_custom_call.1}
  #allocation0 [shape = 'u32[]', space=smem, size = 0x4, offset = 0x4, fixed_abs, tag = 'smem constant byte address 0x4 - core index']
  #allocation1 [shape = 'u32[144,128]{1,0:T(1,128)}', space=vmem, size = 0x12000, scoped, tag = 'internal scratch']
  %s0 = inlined_call_operand.vmem [shape: bf16[512,32], index: 0, kind: input, shape index: {}]
  %s1 = inlined_call_operand.vmem [shape: bf16[32,128], index: 1, kind: input, shape index: {}]
  %s2 = inlined_call_operand.vmem [shape: f32[8,128], index: 2, kind: input, shape index: {}]
  %s3 = inlined_call_operand.hbm [shape: f32[512,128], index: 3, kind: output, shape index: {}]
  %s4 = sld [smem:[#allocation0]]
  $region22: #{tpu_custom_call.1} parent=0
    _
  %s6 = ssub.s32 1, %s4
  %s7 = scalar_select 0, %s6, %s4
  $region1: #{tpu_custom_call.1} parent=0
    #allocation2 [shape = 'u8[262144]{0}', space=vmem, size = 0x40000, scoped, tag = 'output window, operand 0, single buffered']
    #allocation3 [shape = 's32[1]{0}', space=sflag, size = 0x4, scoped, tag = 'scoped memory for tpu_custom_call.1']
    %8 = vsyncpa [#allocation3], 0
    // Predicated region
    $region2: #{tpu_custom_call.1} parent=1 // pred_check
      _
    $region3: #{tpu_custom_call.1} parent=1 // pred_check_branch
      %10 = sbr.rel (0) target = $region5
    $region4: #{tpu_custom_call.1} parent=1 // pred_region
      _
    $region5: #{tpu_custom_call.1} parent=1 // pred_fallthru
      _
    // Predicated region
    $region6: #{tpu_custom_call.1} parent=1 // pred_check
      _
    $region7: #{tpu_custom_call.1} parent=1 // pred_check_branch
      %12 = sbr.rel (0) target = $region9
    $region8: #{tpu_custom_call.1} parent=1 // pred_region
      _
    $region9: #{tpu_custom_call.1} parent=1 // pred_fallthru
      _
    // Predicated region
    $region10: #{tpu_custom_call.1} parent=1 // pred_check
      _
    $region11: #{tpu_custom_call.1} parent=1 // pred_check_branch
      %14 = sbr.rel (0) target = $region13
    $region12: #{tpu_custom_call.1} parent=1 // pred_region
      _
    $region13: #{tpu_custom_call.1} parent=1 // pred_fallthru
      _
    %v16 = vld [vmem:[%s0] sm:$0xf]
    %v17 = vld [vmem:[%s0 + $0x4] sm:$0xf]
    %v18 = vld [vmem:[%s0 + $0x8] sm:$0xf]
    %v19 = vld [vmem:[%s0 + $0xc] sm:$0xf]
    %v20 = vld [vmem:[%s0 + $0x10] sm:$0xf]
    %v21 = vld [vmem:[%s0 + $0x14] sm:$0xf]
    %v22 = vld [vmem:[%s0 + $0x18] sm:$0xf]
    %v23 = vld [vmem:[%s0 + $0x1c] sm:$0xf]
    %v24 = vld [vmem:[%s0 + $0x20] sm:$0xf]
    %v25 = vld [vmem:[%s0 + $0x24] sm:$0xf]
    %v26 = vld [vmem:[%s0 + $0x28] sm:$0xf]
    %v27 = vld [vmem:[%s0 + $0x2c] sm:$0xf]
    %v28 = vld [vmem:[%s0 + $0x30] sm:$0xf]
    %v29 = vld [vmem:[%s0 + $0x34] sm:$0xf]
    %v30 = vld [vmem:[%s0 + $0x38] sm:$0xf]
    %v31 = vld [vmem:[%s0 + $0x3c] sm:$0xf]
    %v32 = vld [vmem:[%s0 + $0x40] sm:$0xf]
    %v33 = vld [vmem:[%s0 + $0x44] sm:$0xf]
    %v34 = vld [vmem:[%s0 + $0x48] sm:$0xf]
    %v35 = vld [vmem:[%s0 + $0x4c] sm:$0xf]
    %v36 = vld [vmem:[%s0 + $0x50] sm:$0xf]
    %v37 = vld [vmem:[%s0 + $0x54] sm:$0xf]
    %v38 = vld [vmem:[%s0 + $0x58] sm:$0xf]
    %v39 = vld [vmem:[%s0 + $0x5c] sm:$0xf]
    %v40 = vld [vmem:[%s0 + $0x60] sm:$0xf]
    %v41 = vld [vmem:[%s0 + $0x64] sm:$0xf]
    %v42 = vld [vmem:[%s0 + $0x68] sm:$0xf]
    %v43 = vld [vmem:[%s0 + $0x6c] sm:$0xf]
    %v44 = vld [vmem:[%s0 + $0x70] sm:$0xf]
    %v45 = vld [vmem:[%s0 + $0x74] sm:$0xf]
    %v46 = vld [vmem:[%s0 + $0x78] sm:$0xf]
    %v47 = vld [vmem:[%s0 + $0x7c] sm:$0xf]
    %v48 = vld [vmem:[%s0 + $0x80] sm:$0xf]
    %v49 = vld [vmem:[%s0 + $0x84] sm:$0xf]
    %v50 = vld [vmem:[%s0 + $0x88] sm:$0xf]
    %v51 = vld [vmem:[%s0 + $0x8c] sm:$0xf]
    %v52 = vld [vmem:[%s0 + $0x90] sm:$0xf]
    %v53 = vld [vmem:[%s0 + $0x94] sm:$0xf]
    %v54 = vld [vmem:[%s0 + $0x98] sm:$0xf]
    %v55 = vld [vmem:[%s0 + $0x9c] sm:$0xf]
    %v56 = vld [vmem:[%s0 + $0xa0] sm:$0xf]
    %v57 = vld [vmem:[%s0 + $0xa4] sm:$0xf]
    %v58 = vld [vmem:[%s0 + $0xa8] sm:$0xf]
    %v59 = vld [vmem:[%s0 + $0xac] sm:$0xf]
    %v60 = vld [vmem:[%s0 + $0xb0] sm:$0xf]
    %v61 = vld [vmem:[%s0 + $0xb4] sm:$0xf]
    %v62 = vld [vmem:[%s0 + $0xb8] sm:$0xf]
    %v63 = vld [vmem:[%s0 + $0xbc] sm:$0xf]
    %v64 = vld [vmem:[%s0 + $0xc0] sm:$0xf]
    %v65 = vld [vmem:[%s0 + $0xc4] sm:$0xf]
    %v66 = vld [vmem:[%s0 + $0xc8] sm:$0xf]
    %v67 = vld [vmem:[%s0 + $0xcc] sm:$0xf]
    %v68 = vld [vmem:[%s0 + $0xd0] sm:$0xf]
    %v69 = vld [vmem:[%s0 + $0xd4] sm:$0xf]
    %v70 = vld [vmem:[%s0 + $0xd8] sm:$0xf]
    %v71 = vld [vmem:[%s0 + $0xdc] sm:$0xf]
    %v72 = vld [vmem:[%s0 + $0xe0] sm:$0xf]
    %v73 = vld [vmem:[%s0 + $0xe4] sm:$0xf]
    %v74 = vld [vmem:[%s0 + $0xe8] sm:$0xf]
    %v75 = vld [vmem:[%s0 + $0xec] sm:$0xf]
    %v76 = vld [vmem:[%s0 + $0xf0] sm:$0xf]
    %v77 = vld [vmem:[%s0 + $0xf4] sm:$0xf]
    %v78 = vld [vmem:[%s0 + $0xf8] sm:$0xf]
    %v79 = vld [vmem:[%s0 + $0xfc] sm:$0xf]
    %v80 = vld [vmem:[%s1] sm:$0xf]
    %v81 = vld [vmem:[%s1 + $0x4] sm:$0xf]
    %v82 = vld [vmem:[%s1 + $0x8] sm:$0xf]
    %v83 = vld [vmem:[%s1 + $0xc] sm:$0xf]
    %v84 = vld [vmem:[%s2] sm:$0x1]
    %v85 = vld [vmem:[%s2 + $0x1] sm:$0x1]
    %v86 = vlaneseq
    %v87 = vshrl.u32 %v86, 7
    %v88 = vsub.s32 0, %v87
    %v89 = vrot.slane %v84, %v88
    %v154 = vunpack.c.l.b16 %v16
    %v155 = vunpack.c.l.b16 %v17
    %v156 = vunpack.c.l.b16 %v18
    %v157 = vunpack.c.l.b16 %v19
    %v158 = vunpack.c.l.b16 %v20
    %v159 = vunpack.c.l.b16 %v21
    %v160 = vunpack.c.l.b16 %v22
    %v161 = vunpack.c.l.b16 %v23
    %v162 = vunpack.c.l.b16 %v24
    %v163 = vunpack.c.l.b16 %v25
    %v164 = vunpack.c.l.b16 %v26
    %v165 = vunpack.c.l.b16 %v27
    %v166 = vunpack.c.l.b16 %v28
    %v167 = vunpack.c.l.b16 %v29
    %v168 = vunpack.c.l.b16 %v30
    %v169 = vunpack.c.l.b16 %v31
    %v170 = vunpack.c.l.b16 %v32
    %v171 = vunpack.c.l.b16 %v33
    %v172 = vunpack.c.l.b16 %v34
    %v173 = vunpack.c.l.b16 %v35
    %v174 = vunpack.c.l.b16 %v36
    %v175 = vunpack.c.l.b16 %v37
    %v176 = vunpack.c.l.b16 %v38
    %v177 = vunpack.c.l.b16 %v39
    %v178 = vunpack.c.l.b16 %v40
    %v179 = vunpack.c.l.b16 %v41
    %v180 = vunpack.c.l.b16 %v42
    %v181 = vunpack.c.l.b16 %v43
    %v182 = vunpack.c.l.b16 %v44
    %v183 = vunpack.c.l.b16 %v45
    %v184 = vunpack.c.l.b16 %v46
    %v185 = vunpack.c.l.b16 %v47
    %v186 = vunpack.c.l.b16 %v48
    %v187 = vunpack.c.l.b16 %v49
    %v188 = vunpack.c.l.b16 %v50
    %v189 = vunpack.c.l.b16 %v51
    %v190 = vunpack.c.l.b16 %v52
    %v191 = vunpack.c.l.b16 %v53
    %v192 = vunpack.c.l.b16 %v54
    %v193 = vunpack.c.l.b16 %v55
    %v194 = vunpack.c.l.b16 %v56
    %v195 = vunpack.c.l.b16 %v57
    %v196 = vunpack.c.l.b16 %v58
    %v197 = vunpack.c.l.b16 %v59
    %v198 = vunpack.c.l.b16 %v60
    %v199 = vunpack.c.l.b16 %v61
    %v200 = vunpack.c.l.b16 %v62
    %v201 = vunpack.c.l.b16 %v63
    %v202 = vunpack.c.l.b16 %v64
    %v203 = vunpack.c.l.b16 %v65
    %v204 = vunpack.c.l.b16 %v66
    %v205 = vunpack.c.l.b16 %v67
    %v206 = vunpack.c.l.b16 %v68
    %v207 = vunpack.c.l.b16 %v69
    %v208 = vunpack.c.l.b16 %v70
    %v209 = vunpack.c.l.b16 %v71
    %v210 = vunpack.c.l.b16 %v72
    %v211 = vunpack.c.l.b16 %v73
    %v212 = vunpack.c.l.b16 %v74
    %v213 = vunpack.c.l.b16 %v75
    %v214 = vunpack.c.l.b16 %v76
    %v215 = vunpack.c.l.b16 %v77
    %v216 = vunpack.c.l.b16 %v78
    %v217 = vunpack.c.l.b16 %v79
    %v218 = vpack.c.b16 %v155, %v154
    %v219 = vpack.c.b16 %v157, %v156
    %v220 = vpack.c.b16 %v159, %v158
    %v221 = vpack.c.b16 %v161, %v160
    %v222 = vpack.c.b16 %v163, %v162
    %v223 = vpack.c.b16 %v165, %v164
    %v224 = vpack.c.b16 %v167, %v166
    %v225 = vpack.c.b16 %v169, %v168
    %v226 = vpack.c.b16 %v171, %v170
    %v227 = vpack.c.b16 %v173, %v172
    %v228 = vpack.c.b16 %v175, %v174
    %v229 = vpack.c.b16 %v177, %v176
    %v230 = vpack.c.b16 %v179, %v178
    %v231 = vpack.c.b16 %v181, %v180
    %v232 = vpack.c.b16 %v183, %v182
    %v233 = vpack.c.b16 %v185, %v184
    %v234 = vpack.c.b16 %v187, %v186
    %v235 = vpack.c.b16 %v189, %v188
    %v236 = vpack.c.b16 %v191, %v190
    %v237 = vpack.c.b16 %v193, %v192
    %v238 = vpack.c.b16 %v195, %v194
    %v239 = vpack.c.b16 %v197, %v196
    %v240 = vpack.c.b16 %v199, %v198
    %v241 = vpack.c.b16 %v201, %v200
    %v242 = vpack.c.b16 %v203, %v202
    %v243 = vpack.c.b16 %v205, %v204
    %v244 = vpack.c.b16 %v207, %v206
    %v245 = vpack.c.b16 %v209, %v208
    %v246 = vpack.c.b16 %v211, %v210
    %v247 = vpack.c.b16 %v213, %v212
    %v248 = vpack.c.b16 %v215, %v214
    %v249 = vpack.c.b16 %v217, %v216
    %v254 = vunpack.c.l.b16 %v80
    %v255 = vunpack.c.l.b16 %v81
    %v256 = vunpack.c.l.b16 %v82
    %v257 = vunpack.c.l.b16 %v83
    %v258 = vpack.c.b16 %v255, %v254
    %v259 = vpack.c.b16 %v257, %v256
    %vm262 = vcmask 261120
    %v264 = vsel %vm262, %v218, 0
    %v267 = vsel %vm262, %v219, 0
    %v270 = vsel %vm262, %v220, 0
    %v273 = vsel %vm262, %v221, 0
    %v276 = vsel %vm262, %v222, 0
    %v279 = vsel %vm262, %v223, 0
    %v282 = vsel %vm262, %v224, 0
    %v285 = vsel %vm262, %v225, 0
    %v288 = vsel %vm262, %v226, 0
    %v291 = vsel %vm262, %v227, 0
    %v294 = vsel %vm262, %v228, 0
    %v297 = vsel %vm262, %v229, 0
    %v300 = vsel %vm262, %v230, 0
    %v303 = vsel %vm262, %v231, 0
    %v306 = vsel %vm262, %v232, 0
    %v309 = vsel %vm262, %v233, 0
    %v312 = vsel %vm262, %v234, 0
    %v315 = vsel %vm262, %v235, 0
    %v318 = vsel %vm262, %v236, 0
    %v321 = vsel %vm262, %v237, 0
    %v324 = vsel %vm262, %v238, 0
    %v327 = vsel %vm262, %v239, 0
    %v330 = vsel %vm262, %v240, 0
    %v333 = vsel %vm262, %v241, 0
    %v336 = vsel %vm262, %v242, 0
    %v339 = vsel %vm262, %v243, 0
    %v342 = vsel %vm262, %v244, 0
    %v345 = vsel %vm262, %v245, 0
    %v348 = vsel %vm262, %v246, 0
    %v351 = vsel %vm262, %v247, 0
    %v354 = vsel %vm262, %v248, 0
    %v357 = vsel %vm262, %v249, 0
    %359 = vmatprep.subr.bf16.mxu0 0
    %360 = vmatpush1.bf16.msra.mxu0 %v258
    %361 = vmatprep.subr.bf16.mxu0 0
    %362 = vmatpush1.bf16.msra.mxu0 %v259
    %363 = vmatprep.subr.bf16.mxu0 0
    %364 = vmatpush1.bf16.msra.mxu0 0
    %365 = vmatprep.subr.bf16.mxu0 0
    %366 = vmatpush1.bf16.msra.mxu0 0
    %367 = vmatprep.subr.bf16.mxu0 0
    %368 = vmatpush1.bf16.msra.mxu0 0
    %369 = vmatprep.subr.bf16.mxu0 0
    %370 = vmatpush1.bf16.msra.mxu0 0
    %371 = vmatprep.subr.bf16.mxu0 0
    %372 = vmatpush1.bf16.msra.mxu0 0
    %373 = vmatprep.subr.bf16.mxu0 0
    %374 = vmatpush1.bf16.msra.mxu0 0
    %375 = vmatprep.subr.bf16.mxu0 0
    %376 = vmatpush1.bf16.msra.mxu0 0
    %377 = vmatprep.subr.bf16.mxu0 0
    %378 = vmatpush1.bf16.msra.mxu0 0
    %379 = vmatprep.subr.bf16.mxu0 0
    %380 = vmatpush1.bf16.msra.mxu0 0
    %381 = vmatprep.subr.bf16.mxu0 0
    %382 = vmatpush1.bf16.msra.mxu0 0
    %383 = vmatprep.subr.bf16.mxu0 0
    %384 = vmatpush1.bf16.msra.mxu0 0
    %385 = vmatprep.subr.bf16.mxu0 0
    %386 = vmatpush1.bf16.msra.mxu0 0
    %387 = vmatprep.subr.bf16.mxu0 0
    %388 = vmatpush1.bf16.msra.mxu0 0
    %389 = vmatprep.subr.bf16.mxu0 0
    %390 = vmatpush1.bf16.msra.mxu0 0
    %391 = vmatprep.mubr.bf16.mxu0 0
    %392 = vmatmul.mubr.bf16.gmra.mrb[0].mxu0 %v264
    %v393 = vpop.f32.mrb[0].mxu0
    %v394 = vadd.f32 %v89, %v393
    %v395 = vpop.f32.mrb[0].mxu0
    %v396 = vpop.f32.mrb[0].mxu0
    %v397 = vadd.f32 %v89, %v396
    %v398 = vpop.f32.mrb[0].mxu0
    %399 = vmatprep.mubr.bf16.mxu0 0
    %400 = vmatmul.mubr.bf16.gmra.mrb[0].mxu0 %v267
    %v401 = vpop.f32.mrb[0].mxu0
    %v402 = vadd.f32 %v89, %v401
    %v403 = vpop.f32.mrb[0].mxu0
    %v404 = vpop.f32.mrb[0].mxu0
    %v405 = vadd.f32 %v89, %v404
    %v406 = vpop.f32.mrb[0].mxu0
    %407 = vmatprep.mubr.bf16.mxu0 0
    %408 = vmatmul.mubr.bf16.gmra.mrb[0].mxu0 %v270
    %v409 = vpop.f32.mrb[0].mxu0
    %v410 = vadd.f32 %v89, %v409
    %v411 = vpop.f32.mrb[0].mxu0
    %v412 = vpop.f32.mrb[0].mxu0
    %v413 = vadd.f32 %v89, %v412
    %v414 = vpop.f32.mrb[0].mxu0
    %415 = vmatprep.mubr.bf16.mxu0 0
    %416 = vmatmul.mubr.bf16.gmra.mrb[0].mxu0 %v273
    %v417 = vpop.f32.mrb[0].mxu0
    %v418 = vadd.f32 %v89, %v417
    %v419 = vpop.f32.mrb[0].mxu0
    %v420 = vpop.f32.mrb[0].mxu0
    %v421 = vadd.f32 %v89, %v420
    %v422 = vpop.f32.mrb[0].mxu0
    %423 = vmatprep.mubr.bf16.mxu0 0
    %424 = vmatmul.mubr.bf16.gmra.mrb[0].mxu0 %v276
    %v425 = vpop.f32.mrb[0].mxu0
    %v426 = vadd.f32 %v89, %v425
    %v427 = vpop.f32.mrb[0].mxu0
    %v428 = vpop.f32.mrb[0].mxu0
    %v429 = vadd.f32 %v89, %v428
    %v430 = vpop.f32.mrb[0].mxu0
    %431 = vmatprep.mubr.bf16.mxu0 0
    %432 = vmatmul.mubr.bf16.gmra.mrb[0].mxu0 %v279
    %v433 = vpop.f32.mrb[0].mxu0
    %v434 = vadd.f32 %v89, %v433
    %v435 = vpop.f32.mrb[0].mxu0
    %v436 = vpop.f32.mrb[0].mxu0
    %v437 = vadd.f32 %v89, %v436
    %v438 = vpop.f32.mrb[0].mxu0
    %439 = vmatprep.mubr.bf16.mxu0 0
    %440 = vmatmul.mubr.bf16.gmra.mrb[0].mxu0 %v282
    %v441 = vpop.f32.mrb[0].mxu0
    %v442 = vadd.f32 %v89, %v441
    %v443 = vpop.f32.mrb[0].mxu0
    %v444 = vpop.f32.mrb[0].mxu0
    %v445 = vadd.f32 %v89, %v444
    %v446 = vpop.f32.mrb[0].mxu0
    %447 = vmatprep.mubr.bf16.mxu0 0
    %448 = vmatmul.mubr.bf16.gmra.mrb[0].mxu0 %v285
    %v449 = vpop.f32.mrb[0].mxu0
    %v450 = vadd.f32 %v89, %v449
    %v451 = vpop.f32.mrb[0].mxu0
    %v452 = vpop.f32.mrb[0].mxu0
    %v453 = vadd.f32 %v89, %v452
    %v454 = vpop.f32.mrb[0].mxu0
    %455 = vmatprep.mubr.bf16.mxu0 0
    %456 = vmatmul.mubr.bf16.gmra.mrb[0].mxu0 %v288
    %v457 = vpop.f32.mrb[0].mxu0
    %v458 = vadd.f32 %v89, %v457
    %v459 = vpop.f32.mrb[0].mxu0
    %v460 = vpop.f32.mrb[0].mxu0
    %v461 = vadd.f32 %v89, %v460
    %v462 = vpop.f32.mrb[0].mxu0
    %463 = vmatprep.mubr.bf16.mxu0 0
    %464 = vmatmul.mubr.bf16.gmra.mrb[0].mxu0 %v291
    %v465 = vpop.f32.mrb[0].mxu0
    %v466 = vadd.f32 %v89, %v465
    %v467 = vpop.f32.mrb[0].mxu0
    %v468 = vpop.f32.mrb[0].mxu0
    %v469 = vadd.f32 %v89, %v468
    %v470 = vpop.f32.mrb[0].mxu0
    %471 = vmatprep.mubr.bf16.mxu0 0
    %472 = vmatmul.mubr.bf16.gmra.mrb[0].mxu0 %v294
    %v473 = vpop.f32.mrb[0].mxu0
    %v474 = vadd.f32 %v89, %v473
    %v475 = vpop.f32.mrb[0].mxu0
    %v476 = vpop.f32.mrb[0].mxu0
    %v477 = vadd.f32 %v89, %v476
    %v478 = vpop.f32.mrb[0].mxu0
    %479 = vmatprep.mubr.bf16.mxu0 0
    %480 = vmatmul.mubr.bf16.gmra.mrb[0].mxu0 %v297
    %v481 = vpop.f32.mrb[0].mxu0
    %v482 = vadd.f32 %v89, %v481
    %v483 = vpop.f32.mrb[0].mxu0
    %v484 = vpop.f32.mrb[0].mxu0
    %v485 = vadd.f32 %v89, %v484
    %v486 = vpop.f32.mrb[0].mxu0
    %487 = vmatprep.mubr.bf16.mxu0 0
    %488 = vmatmul.mubr.bf16.gmra.mrb[0].mxu0 %v300
    %v489 = vpop.f32.mrb[0].mxu0
    %v490 = vadd.f32 %v89, %v489
    %v491 = vpop.f32.mrb[0].mxu0
    %v492 = vpop.f32.mrb[0].mxu0
    %v493 = vadd.f32 %v89, %v492
    %v494 = vpop.f32.mrb[0].mxu0
    %495 = vmatprep.mubr.bf16.mxu0 0
    %496 = vmatmul.mubr.bf16.gmra.mrb[0].mxu0 %v303
    %v497 = vpop.f32.mrb[0].mxu0
    %v498 = vadd.f32 %v89, %v497
    %v499 = vpop.f32.mrb[0].mxu0
    %v500 = vpop.f32.mrb[0].mxu0
    %v501 = vadd.f32 %v89, %v500
    %v502 = vpop.f32.mrb[0].mxu0
    %503 = vmatprep.mubr.bf16.mxu0 0
    %504 = vmatmul.mubr.bf16.gmra.mrb[0].mxu0 %v306
    %v505 = vpop.f32.mrb[0].mxu0
    %v506 = vadd.f32 %v89, %v505
    %v507 = vpop.f32.mrb[0].mxu0
    %v508 = vpop.f32.mrb[0].mxu0
    %v509 = vadd.f32 %v89, %v508
    %v510 = vpop.f32.mrb[0].mxu0
    %511 = vmatprep.mubr.bf16.mxu0 0
    %512 = vmatmul.mubr.bf16.gmra.mrb[0].mxu0 %v309
    %v513 = vpop.f32.mrb[0].mxu0
    %v514 = vadd.f32 %v89, %v513
    %v515 = vpop.f32.mrb[0].mxu0
    %v516 = vpop.f32.mrb[0].mxu0
    %v517 = vadd.f32 %v89, %v516
    %v518 = vpop.f32.mrb[0].mxu0
    %519 = vmatprep.mubr.bf16.mxu0 0
    %520 = vmatmul.mubr.bf16.gmra.mrb[0].mxu0 %v312
    %v521 = vpop.f32.mrb[0].mxu0
    %v522 = vadd.f32 %v89, %v521
    %v523 = vpop.f32.mrb[0].mxu0
    %v524 = vpop.f32.mrb[0].mxu0
    %v525 = vadd.f32 %v89, %v524
    %v526 = vpop.f32.mrb[0].mxu0
    %527 = vmatprep.mubr.bf16.mxu0 0
    %528 = vmatmul.mubr.bf16.gmra.mrb[0].mxu0 %v315
    %v529 = vpop.f32.mrb[0].mxu0
    %v530 = vadd.f32 %v89, %v529
    %v531 = vpop.f32.mrb[0].mxu0
    %v532 = vpop.f32.mrb[0].mxu0
    %v533 = vadd.f32 %v89, %v532
    %v534 = vpop.f32.mrb[0].mxu0
    %535 = vmatprep.mubr.bf16.mxu0 0
    %536 = vmatmul.mubr.bf16.gmra.mrb[0].mxu0 %v318
    %v537 = vpop.f32.mrb[0].mxu0
    %v538 = vadd.f32 %v89, %v537
    %v539 = vpop.f32.mrb[0].mxu0
    %v540 = vpop.f32.mrb[0].mxu0
    %v541 = vadd.f32 %v89, %v540
    %v542 = vpop.f32.mrb[0].mxu0
    %543 = vmatprep.mubr.bf16.mxu0 0
    %544 = vmatmul.mubr.bf16.gmra.mrb[0].mxu0 %v321
    %v545 = vpop.f32.mrb[0].mxu0
    %v546 = vadd.f32 %v89, %v545
    %v547 = vpop.f32.mrb[0].mxu0
    %v548 = vpop.f32.mrb[0].mxu0
    %v549 = vadd.f32 %v89, %v548
    %v550 = vpop.f32.mrb[0].mxu0
    %551 = vmatprep.mubr.bf16.mxu0 0
    %552 = vmatmul.mubr.bf16.gmra.mrb[0].mxu0 %v324
    %v553 = vpop.f32.mrb[0].mxu0
    %v554 = vadd.f32 %v89, %v553
    %v555 = vpop.f32.mrb[0].mxu0
    %v556 = vpop.f32.mrb[0].mxu0
    %v557 = vadd.f32 %v89, %v556
    %v558 = vpop.f32.mrb[0].mxu0
    %559 = vmatprep.mubr.bf16.mxu0 0
    %560 = vmatmul.mubr.bf16.gmra.mrb[0].mxu0 %v327
    %v561 = vpop.f32.mrb[0].mxu0
    %v562 = vadd.f32 %v89, %v561
    %v563 = vpop.f32.mrb[0].mxu0
    %v564 = vpop.f32.mrb[0].mxu0
    %v565 = vadd.f32 %v89, %v564
    %v566 = vpop.f32.mrb[0].mxu0
    %567 = vmatprep.mubr.bf16.mxu0 0
    %568 = vmatmul.mubr.bf16.gmra.mrb[0].mxu0 %v330
    %v569 = vpop.f32.mrb[0].mxu0
    %v570 = vadd.f32 %v89, %v569
    %v571 = vpop.f32.mrb[0].mxu0
    %v572 = vpop.f32.mrb[0].mxu0
    %v573 = vadd.f32 %v89, %v572
    %v574 = vpop.f32.mrb[0].mxu0
    %575 = vmatprep.mubr.bf16.mxu0 0
    %576 = vmatmul.mubr.bf16.gmra.mrb[0].mxu0 %v333
    %v577 = vpop.f32.mrb[0].mxu0
    %v578 = vadd.f32 %v89, %v577
    %v579 = vpop.f32.mrb[0].mxu0
    %v580 = vpop.f32.mrb[0].mxu0
    %v581 = vadd.f32 %v89, %v580
    %v582 = vpop.f32.mrb[0].mxu0
    %583 = vmatprep.mubr.bf16.mxu0 0
    %584 = vmatmul.mubr.bf16.gmra.mrb[0].mxu0 %v336
    %v585 = vpop.f32.mrb[0].mxu0
    %v586 = vadd.f32 %v89, %v585
    %v587 = vpop.f32.mrb[0].mxu0
    %v588 = vpop.f32.mrb[0].mxu0
    %v589 = vadd.f32 %v89, %v588
    %v590 = vpop.f32.mrb[0].mxu0
    %591 = vmatprep.mubr.bf16.mxu0 0
    %592 = vmatmul.mubr.bf16.gmra.mrb[0].mxu0 %v339
    %v593 = vpop.f32.mrb[0].mxu0
    %v594 = vadd.f32 %v89, %v593
    %v595 = vpop.f32.mrb[0].mxu0
    %v596 = vpop.f32.mrb[0].mxu0
    %v597 = vadd.f32 %v89, %v596
    %v598 = vpop.f32.mrb[0].mxu0
    %599 = vmatprep.mubr.bf16.mxu0 0
    %600 = vmatmul.mubr.bf16.gmra.mrb[0].mxu0 %v342
    %v601 = vpop.f32.mrb[0].mxu0
    %v602 = vadd.f32 %v89, %v601
    %v603 = vpop.f32.mrb[0].mxu0
    %v604 = vpop.f32.mrb[0].mxu0
    %v605 = vadd.f32 %v89, %v604
    %v606 = vpop.f32.mrb[0].mxu0
    %607 = vmatprep.mubr.bf16.mxu0 0
    %608 = vmatmul.mubr.bf16.gmra.mrb[0].mxu0 %v345
    %v609 = vpop.f32.mrb[0].mxu0
    %v610 = vadd.f32 %v89, %v609
    %v611 = vpop.f32.mrb[0].mxu0
    %v612 = vpop.f32.mrb[0].mxu0
    %v613 = vadd.f32 %v89, %v612
    %v614 = vpop.f32.mrb[0].mxu0
    %615 = vmatprep.mubr.bf16.mxu0 0
    %616 = vmatmul.mubr.bf16.gmra.mrb[0].mxu0 %v348
    %v617 = vpop.f32.mrb[0].mxu0
    %v618 = vadd.f32 %v89, %v617
    %v619 = vpop.f32.mrb[0].mxu0
    %v620 = vpop.f32.mrb[0].mxu0
    %v621 = vadd.f32 %v89, %v620
    %v622 = vpop.f32.mrb[0].mxu0
    %623 = vmatprep.mubr.bf16.mxu0 0
    %624 = vmatmul.mubr.bf16.gmra.mrb[0].mxu0 %v351
    %v625 = vpop.f32.mrb[0].mxu0
    %v626 = vadd.f32 %v89, %v625
    %v627 = vpop.f32.mrb[0].mxu0
    %v628 = vpop.f32.mrb[0].mxu0
    %v629 = vadd.f32 %v89, %v628
    %v630 = vpop.f32.mrb[0].mxu0
    %631 = vmatprep.mubr.bf16.mxu0 0
    %632 = vmatmul.mubr.bf16.gmra.mrb[0].mxu0 %v354
    %v633 = vpop.f32.mrb[0].mxu0
    %v634 = vadd.f32 %v89, %v633
    %v635 = vpop.f32.mrb[0].mxu0
    %v636 = vpop.f32.mrb[0].mxu0
    %v637 = vadd.f32 %v89, %v636
    %v638 = vpop.f32.mrb[0].mxu0
    %639 = vmatprep.mubr.bf16.mxu0 0
    %640 = vmatmul.mubr.bf16.gmra.mrb[0].mxu0 %v357
    %v641 = vpop.f32.mrb[0].mxu0
    %v642 = vadd.f32 %v89, %v641
    %v643 = vpop.f32.mrb[0].mxu0
    %v644 = vpop.f32.mrb[0].mxu0
    %v645 = vadd.f32 %v89, %v644
    %v646 = vpop.f32.mrb[0].mxu0
    %647 = vdwg.mxu0
    %vm648 = vcmp.ge.f32.partialorder %v394, 0.0
    %vm649 = vcmp.ge.f32.partialorder %v397, 0.0
    %vm650 = vcmp.ge.f32.partialorder %v402, 0.0
    %vm651 = vcmp.ge.f32.partialorder %v405, 0.0
    %vm652 = vcmp.ge.f32.partialorder %v410, 0.0
    %vm653 = vcmp.ge.f32.partialorder %v413, 0.0
    %vm654 = vcmp.ge.f32.partialorder %v418, 0.0
    %vm655 = vcmp.ge.f32.partialorder %v421, 0.0
    %vm656 = vcmp.ge.f32.partialorder %v426, 0.0
    %vm657 = vcmp.ge.f32.partialorder %v429, 0.0
    %vm658 = vcmp.ge.f32.partialorder %v434, 0.0
    %vm659 = vcmp.ge.f32.partialorder %v437, 0.0
    %vm660 = vcmp.ge.f32.partialorder %v442, 0.0
    %vm661 = vcmp.ge.f32.partialorder %v445, 0.0
    %vm662 = vcmp.ge.f32.partialorder %v450, 0.0
    %vm663 = vcmp.ge.f32.partialorder %v453, 0.0
    %vm664 = vcmp.ge.f32.partialorder %v458, 0.0
    %vm665 = vcmp.ge.f32.partialorder %v461, 0.0
    %vm666 = vcmp.ge.f32.partialorder %v466, 0.0
    %vm667 = vcmp.ge.f32.partialorder %v469, 0.0
    %vm668 = vcmp.ge.f32.partialorder %v474, 0.0
    %vm669 = vcmp.ge.f32.partialorder %v477, 0.0
    %vm670 = vcmp.ge.f32.partialorder %v482, 0.0
    %vm671 = vcmp.ge.f32.partialorder %v485, 0.0
    %vm672 = vcmp.ge.f32.partialorder %v490, 0.0
    %vm673 = vcmp.ge.f32.partialorder %v493, 0.0
    %vm674 = vcmp.ge.f32.partialorder %v498, 0.0
    %vm675 = vcmp.ge.f32.partialorder %v501, 0.0
    %vm676 = vcmp.ge.f32.partialorder %v506, 0.0
    %vm677 = vcmp.ge.f32.partialorder %v509, 0.0
    %vm678 = vcmp.ge.f32.partialorder %v514, 0.0
    %vm679 = vcmp.ge.f32.partialorder %v517, 0.0
    %vm680 = vcmp.ge.f32.partialorder %v522, 0.0
    %vm681 = vcmp.ge.f32.partialorder %v525, 0.0
    %vm682 = vcmp.ge.f32.partialorder %v530, 0.0
    %vm683 = vcmp.ge.f32.partialorder %v533, 0.0
    %vm684 = vcmp.ge.f32.partialorder %v538, 0.0
    %vm685 = vcmp.ge.f32.partialorder %v541, 0.0
    %vm686 = vcmp.ge.f32.partialorder %v546, 0.0
    %vm687 = vcmp.ge.f32.partialorder %v549, 0.0
    %vm688 = vcmp.ge.f32.partialorder %v554, 0.0
    %vm689 = vcmp.ge.f32.partialorder %v557, 0.0
    %vm690 = vcmp.ge.f32.partialorder %v562, 0.0
    %vm691 = vcmp.ge.f32.partialorder %v565, 0.0
    %vm692 = vcmp.ge.f32.partialorder %v570, 0.0
    %vm693 = vcmp.ge.f32.partialorder %v573, 0.0
    %vm694 = vcmp.ge.f32.partialorder %v578, 0.0
    %vm695 = vcmp.ge.f32.partialorder %v581, 0.0
    %vm696 = vcmp.ge.f32.partialorder %v586, 0.0
    %vm697 = vcmp.ge.f32.partialorder %v589, 0.0
    %vm698 = vcmp.ge.f32.partialorder %v594, 0.0
    %vm699 = vcmp.ge.f32.partialorder %v597, 0.0
    %vm700 = vcmp.ge.f32.partialorder %v602, 0.0
    %vm701 = vcmp.ge.f32.partialorder %v605, 0.0
    %vm702 = vcmp.ge.f32.partialorder %v610, 0.0
    %vm703 = vcmp.ge.f32.partialorder %v613, 0.0
    %vm704 = vcmp.ge.f32.partialorder %v618, 0.0
    %vm705 = vcmp.ge.f32.partialorder %v621, 0.0
    %vm706 = vcmp.ge.f32.partialorder %v626, 0.0
    %vm707 = vcmp.ge.f32.partialorder %v629, 0.0
    %vm708 = vcmp.ge.f32.partialorder %v634, 0.0
    %vm709 = vcmp.ge.f32.partialorder %v637, 0.0
    %vm710 = vcmp.ge.f32.partialorder %v642, 0.0
    %vm711 = vcmp.ge.f32.partialorder %v645, 0.0
    %v712 = vlaneseq
    %v713 = vshrl.u32 %v712, 7
    %v714 = vsub.s32 0, %v713
    %v715 = vrot.slane %v85, %v714
    %v716 = vmul.f32 %v715, %v394
    %v717 = vmul.f32 %v715, %v397
    %v718 = vmul.f32 %v715, %v402
    %v719 = vmul.f32 %v715, %v405
    %v720 = vmul.f32 %v715, %v410
    %v721 = vmul.f32 %v715, %v413
    %v722 = vmul.f32 %v715, %v418
    %v723 = vmul.f32 %v715, %v421
    %v724 = vmul.f32 %v715, %v426
    %v725 = vmul.f32 %v715, %v429
    %v726 = vmul.f32 %v715, %v434
    %v727 = vmul.f32 %v715, %v437
    %v728 = vmul.f32 %v715, %v442
    %v729 = vmul.f32 %v715, %v445
    %v730 = vmul.f32 %v715, %v450
    %v731 = vmul.f32 %v715, %v453
    %v732 = vmul.f32 %v715, %v458
    %v733 = vmul.f32 %v715, %v461
    %v734 = vmul.f32 %v715, %v466
    %v735 = vmul.f32 %v715, %v469
    %v736 = vmul.f32 %v715, %v474
    %v737 = vmul.f32 %v715, %v477
    %v738 = vmul.f32 %v715, %v482
    %v739 = vmul.f32 %v715, %v485
    %v740 = vmul.f32 %v715, %v490
    %v741 = vmul.f32 %v715, %v493
    %v742 = vmul.f32 %v715, %v498
    %v743 = vmul.f32 %v715, %v501
    %v744 = vmul.f32 %v715, %v506
    %v745 = vmul.f32 %v715, %v509
    %v746 = vmul.f32 %v715, %v514
    %v747 = vmul.f32 %v715, %v517
    %v748 = vmul.f32 %v715, %v522
    %v749 = vmul.f32 %v715, %v525
    %v750 = vmul.f32 %v715, %v530
    %v751 = vmul.f32 %v715, %v533
    %v752 = vmul.f32 %v715, %v538
    %v753 = vmul.f32 %v715, %v541
    %v754 = vmul.f32 %v715, %v546
    %v755 = vmul.f32 %v715, %v549
    %v756 = vmul.f32 %v715, %v554
    %v757 = vmul.f32 %v715, %v557
    %v758 = vmul.f32 %v715, %v562
    %v759 = vmul.f32 %v715, %v565
    %v760 = vmul.f32 %v715, %v570
    %v761 = vmul.f32 %v715, %v573
    %v762 = vmul.f32 %v715, %v578
    %v763 = vmul.f32 %v715, %v581
    %v764 = vmul.f32 %v715, %v586
    %v765 = vmul.f32 %v715, %v589
    %v766 = vmul.f32 %v715, %v594
    %v767 = vmul.f32 %v715, %v597
    %v768 = vmul.f32 %v715, %v602
    %v769 = vmul.f32 %v715, %v605
    %v770 = vmul.f32 %v715, %v610
    %v771 = vmul.f32 %v715, %v613
    %v772 = vmul.f32 %v715, %v618
    %v773 = vmul.f32 %v715, %v621
    %v774 = vmul.f32 %v715, %v626
    %v775 = vmul.f32 %v715, %v629
    %v776 = vmul.f32 %v715, %v634
    %v777 = vmul.f32 %v715, %v637
    %v778 = vmul.f32 %v715, %v642
    %v779 = vmul.f32 %v715, %v645
    %v780 = vsel %vm648, %v394, %v716
    %v781 = vsel %vm649, %v397, %v717
    %v782 = vsel %vm650, %v402, %v718
    %v783 = vsel %vm651, %v405, %v719
    %v784 = vsel %vm652, %v410, %v720
    %v785 = vsel %vm653, %v413, %v721
    %v786 = vsel %vm654, %v418, %v722
    %v787 = vsel %vm655, %v421, %v723
    %v788 = vsel %vm656, %v426, %v724
    %v789 = vsel %vm657, %v429, %v725
    %v790 = vsel %vm658, %v434, %v726
    %v791 = vsel %vm659, %v437, %v727
    %v792 = vsel %vm660, %v442, %v728
    %v793 = vsel %vm661, %v445, %v729
    %v794 = vsel %vm662, %v450, %v730
    %v795 = vsel %vm663, %v453, %v731
    %v796 = vsel %vm664, %v458, %v732
    %v797 = vsel %vm665, %v461, %v733
    %v798 = vsel %vm666, %v466, %v734
    %v799 = vsel %vm667, %v469, %v735
    %v800 = vsel %vm668, %v474, %v736
    %v801 = vsel %vm669, %v477, %v737
    %v802 = vsel %vm670, %v482, %v738
    %v803 = vsel %vm671, %v485, %v739
    %v804 = vsel %vm672, %v490, %v740
    %v805 = vsel %vm673, %v493, %v741
    %v806 = vsel %vm674, %v498, %v742
    %v807 = vsel %vm675, %v501, %v743
    %v808 = vsel %vm676, %v506, %v744
    %v809 = vsel %vm677, %v509, %v745
    %v810 = vsel %vm678, %v514, %v746
    %v811 = vsel %vm679, %v517, %v747
    %v812 = vsel %vm680, %v522, %v748
    %v813 = vsel %vm681, %v525, %v749
    %v814 = vsel %vm682, %v530, %v750
    %v815 = vsel %vm683, %v533, %v751
    %v816 = vsel %vm684, %v538, %v752
    %v817 = vsel %vm685, %v541, %v753
    %v818 = vsel %vm686, %v546, %v754
    %v819 = vsel %vm687, %v549, %v755
    %v820 = vsel %vm688, %v554, %v756
    %v821 = vsel %vm689, %v557, %v757
    %v822 = vsel %vm690, %v562, %v758
    %v823 = vsel %vm691, %v565, %v759
    %v824 = vsel %vm692, %v570, %v760
    %v825 = vsel %vm693, %v573, %v761
    %v826 = vsel %vm694, %v578, %v762
    %v827 = vsel %vm695, %v581, %v763
    %v828 = vsel %vm696, %v586, %v764
    %v829 = vsel %vm697, %v589, %v765
    %v830 = vsel %vm698, %v594, %v766
    %v831 = vsel %vm699, %v597, %v767
    %v832 = vsel %vm700, %v602, %v768
    %v833 = vsel %vm701, %v605, %v769
    %v834 = vsel %vm702, %v610, %v770
    %v835 = vsel %vm703, %v613, %v771
    %v836 = vsel %vm704, %v618, %v772
    %v837 = vsel %vm705, %v621, %v773
    %v838 = vsel %vm706, %v626, %v774
    %v839 = vsel %vm707, %v629, %v775
    %v840 = vsel %vm708, %v634, %v776
    %v841 = vsel %vm709, %v637, %v777
    %v842 = vsel %vm710, %v642, %v778
    %v843 = vsel %vm711, %v645, %v779
    %844 = vst [vmem:[#allocation2] sm:$0xff] %v780
    %845 = vst [vmem:[#allocation2 + $0x8] sm:$0xff] %v781
    %846 = vst [vmem:[#allocation2 + $0x10] sm:$0xff] %v782
    %847 = vst [vmem:[#allocation2 + $0x18] sm:$0xff] %v783
    %848 = vst [vmem:[#allocation2 + $0x20] sm:$0xff] %v784
    %849 = vst [vmem:[#allocation2 + $0x28] sm:$0xff] %v785
    %850 = vst [vmem:[#allocation2 + $0x30] sm:$0xff] %v786
    %851 = vst [vmem:[#allocation2 + $0x38] sm:$0xff] %v787
    %852 = vst [vmem:[#allocation2 + $0x40] sm:$0xff] %v788
    %853 = vst [vmem:[#allocation2 + $0x48] sm:$0xff] %v789
    %854 = vst [vmem:[#allocation2 + $0x50] sm:$0xff] %v790
    %855 = vst [vmem:[#allocation2 + $0x58] sm:$0xff] %v791
    %856 = vst [vmem:[#allocation2 + $0x60] sm:$0xff] %v792
    %857 = vst [vmem:[#allocation2 + $0x68] sm:$0xff] %v793
    %858 = vst [vmem:[#allocation2 + $0x70] sm:$0xff] %v794
    %859 = vst [vmem:[#allocation2 + $0x78] sm:$0xff] %v795
    %860 = vst [vmem:[#allocation2 + $0x80] sm:$0xff] %v796
    %861 = vst [vmem:[#allocation2 + $0x88] sm:$0xff] %v797
    %862 = vst [vmem:[#allocation2 + $0x90] sm:$0xff] %v798
    %863 = vst [vmem:[#allocation2 + $0x98] sm:$0xff] %v799
    %864 = vst [vmem:[#allocation2 + $0xa0] sm:$0xff] %v800
    %865 = vst [vmem:[#allocation2 + $0xa8] sm:$0xff] %v801
    %866 = vst [vmem:[#allocation2 + $0xb0] sm:$0xff] %v802
    %867 = vst [vmem:[#allocation2 + $0xb8] sm:$0xff] %v803
    %868 = vst [vmem:[#allocation2 + $0xc0] sm:$0xff] %v804
    %869 = vst [vmem:[#allocation2 + $0xc8] sm:$0xff] %v805
    %870 = vst [vmem:[#allocation2 + $0xd0] sm:$0xff] %v806
    %871 = vst [vmem:[#allocation2 + $0xd8] sm:$0xff] %v807
    %872 = vst [vmem:[#allocation2 + $0xe0] sm:$0xff] %v808
    %873 = vst [vmem:[#allocation2 + $0xe8] sm:$0xff] %v809
    %874 = vst [vmem:[#allocation2 + $0xf0] sm:$0xff] %v810
    %875 = vst [vmem:[#allocation2 + $0xf8] sm:$0xff] %v811
    %876 = vst [vmem:[#allocation2 + $0x100] sm:$0xff] %v812
    %877 = vst [vmem:[#allocation2 + $0x108] sm:$0xff] %v813
    %878 = vst [vmem:[#allocation2 + $0x110] sm:$0xff] %v814
    %879 = vst [vmem:[#allocation2 + $0x118] sm:$0xff] %v815
    %880 = vst [vmem:[#allocation2 + $0x120] sm:$0xff] %v816
    %881 = vst [vmem:[#allocation2 + $0x128] sm:$0xff] %v817
    %882 = vst [vmem:[#allocation2 + $0x130] sm:$0xff] %v818
    %883 = vst [vmem:[#allocation2 + $0x138] sm:$0xff] %v819
    %884 = vst [vmem:[#allocation2 + $0x140] sm:$0xff] %v820
    %885 = vst [vmem:[#allocation2 + $0x148] sm:$0xff] %v821
    %886 = vst [vmem:[#allocation2 + $0x150] sm:$0xff] %v822
    %887 = vst [vmem:[#allocation2 + $0x158] sm:$0xff] %v823
    %888 = vst [vmem:[#allocation2 + $0x160] sm:$0xff] %v824
    %889 = vst [vmem:[#allocation2 + $0x168] sm:$0xff] %v825
    %890 = vst [vmem:[#allocation2 + $0x170] sm:$0xff] %v826
    %891 = vst [vmem:[#allocation2 + $0x178] sm:$0xff] %v827
    %892 = vst [vmem:[#allocation2 + $0x180] sm:$0xff] %v828
    %893 = vst [vmem:[#allocation2 + $0x188] sm:$0xff] %v829
    %894 = vst [vmem:[#allocation2 + $0x190] sm:$0xff] %v830
    %895 = vst [vmem:[#allocation2 + $0x198] sm:$0xff] %v831
    %896 = vst [vmem:[#allocation2 + $0x1a0] sm:$0xff] %v832
    %897 = vst [vmem:[#allocation2 + $0x1a8] sm:$0xff] %v833
    %898 = vst [vmem:[#allocation2 + $0x1b0] sm:$0xff] %v834
    %899 = vst [vmem:[#allocation2 + $0x1b8] sm:$0xff] %v835
    %900 = vst [vmem:[#allocation2 + $0x1c0] sm:$0xff] %v836
    %901 = vst [vmem:[#allocation2 + $0x1c8] sm:$0xff] %v837
    %902 = vst [vmem:[#allocation2 + $0x1d0] sm:$0xff] %v838
    %903 = vst [vmem:[#allocation2 + $0x1d8] sm:$0xff] %v839
    %904 = vst [vmem:[#allocation2 + $0x1e0] sm:$0xff] %v840
    %905 = vst [vmem:[#allocation2 + $0x1e8] sm:$0xff] %v841
    %906 = vst [vmem:[#allocation2 + $0x1f0] sm:$0xff] %v842
    %907 = vst [vmem:[#allocation2 + $0x1f8] sm:$0xff] %v843
    // Predicated region
    $region14: #{tpu_custom_call.1} parent=1 // pred_check
      _
    $region15: #{tpu_custom_call.1} parent=1 // pred_check_branch
      %909 = sbr.rel (0) target = $region17
    $region16: #{tpu_custom_call.1} parent=1 // pred_region
      %s911 = ssub.s32 8192, 8192
      %912 = vsyncadd [#allocation3], %s911
      %s913 = sshll.u32 [#allocation2], 4
      %s914 = int_to_ptr.vmem [resolvable:$true] %s913
      %919 = dma.vmem_to_hbm [thread:$0]  %s914, 8192, %s3, [#allocation3], 128, 128, 8
    $region17: #{tpu_custom_call.1} parent=1 // pred_fallthru
      _
    // Predicated region
    $region18: #{tpu_custom_call.1} parent=1 // pred_check
      _
    $region19: #{tpu_custom_call.1} parent=1 // pred_check_branch
      %921 = sbr.rel (0) target = $region21
    $region20: #{tpu_custom_call.1} parent=1 // pred_region
      %922 = dma.done [#allocation3], 8192
    $region21: #{tpu_custom_call.1} parent=1 // pred_fallthru
      _
    %923 = vsyncpa [#allocation3], 1

</llo_original>
